<compile_context>
chip_gen: v5e
topology: v5e:2x2
jax: 0.10.0
libtpu: 0.0.40
codegen_flags: <defaults>
</compile_context>

<pallas_src>
import functools

import jax
import jax.numpy as jnp
from jax import lax
from jax.experimental import pallas as pl
from jax.experimental.pallas import tpu as pltpu


def _groupnorm1_kernel(x_ref, g_ref, b_ref, o_ref, *, eps):
    # x_ref : (1, C, H*W)  one batch element, f32, lanes = H*W (lane-dense)
    # g_ref : (C, 1)       per-channel gamma, broadcasts over lanes
    # b_ref : (C, 1)       per-channel beta
    # o_ref : (1, C, H*W)
    x = x_ref[0]                                   # (C, HW)
    n = x.shape[0] * x.shape[1]
    inv_n = 1.0 / float(n)
    mean = jnp.sum(x) * inv_n                      # scalar (XLU reduce)
    d = x - mean
    var = jnp.sum(d * d) * inv_n                   # biased variance (PyTorch GN)
    inv = lax.rsqrt(var + eps)                     # EUP slot, not a VALU divide
    o_ref[0] = d * (g_ref[...] * inv) + b_ref[...]


def prenorm_forward(x_nchw, gamma, beta, fn=None, *, eps=1e-5):
    """PreNorm.forward: GroupNorm(1, C)(x) then fn(.).  x: (B, C, H, W) NCHW."""
    B, C, H, W = x_nchw.shape
    HW = H * W

    # glue: flatten spatial dims so H*W sits on the lane axis (pure reshape,
    # no transpose / relayout needed from NCHW).
    x2 = x_nchw.reshape(B, C, HW).astype(jnp.float32)
    g2 = gamma.astype(jnp.float32).reshape(C, 1)
    b2 = beta.astype(jnp.float32).reshape(C, 1)

    y = pl.pallas_call(
        functools.partial(_groupnorm1_kernel, eps=eps),
        out_shape=jax.ShapeDtypeStruct((B, C, HW), jnp.float32),
        grid_spec=pltpu.PrefetchScalarGridSpec(
            num_scalar_prefetch=0,
            grid=(B,),
            in_specs=[
                pl.BlockSpec((1, C, HW), lambda i: (i, 0, 0)),   # this sample only
                pl.BlockSpec((C, 1), lambda i: (0, 0)),          # gamma (tiny, resident)
                pl.BlockSpec((C, 1), lambda i: (0, 0)),          # beta
            ],
            out_specs=pl.BlockSpec((1, C, HW), lambda i: (i, 0, 0)),
        ),
        compiler_params=pltpu.CompilerParams(
            dimension_semantics=("parallel",)),    # batch elements are independent
    )(x2, g2, b2).reshape(B, C, H, W)

    # TODO(synk): self.fn is an arbitrary injected sub-module (Attention,
    # LinearAttention, ...); there is no fixed op to lower here, so it is
    # applied as a plain-JAX callable on the normalized output.
    return fn(y) if fn is not None else y


# ----------------------- pure-JAX reference (for verification) ----------------
def _ref_prenorm(x, gamma, beta, fn, eps=1e-5):
    B, C, H, W = x.shape
    mu = x.reshape(B, -1).mean(axis=1).reshape(B, 1, 1, 1)
    var = ((x - mu) ** 2).reshape(B, -1).mean(axis=1).reshape(B, 1, 1, 1)
    y = (x - mu) / jnp.sqrt(var + eps)
    y = y * gamma[None, :, None, None] + beta[None, :, None, None]
    return fn(y) if fn is not None else y


if __name__ == "__main__":
    B, C, H, W = 2, 4, 16, 16

    key = jax.random.PRNGKey(0)
    kx, kg, kb, kw = jax.random.split(key, 4)
    x = jax.random.normal(kx, (B, C, H, W), jnp.float32)
    gamma = 1.0 + 0.1 * jax.random.normal(kg, (C,), jnp.float32)   # nn.GroupNorm affine
    beta = 0.1 * jax.random.normal(kb, (C,), jnp.float32)

    # Example wrapped module `fn`: a fixed 1x1 pointwise projection (the kind of
    # op PreNorm typically wraps in unet.py).  The same callable is used for the
    # kernel path and the reference path.
    w_fn = 0.3 * jax.random.normal(kw, (C, C), jnp.float32)
    fn = lambda y: jnp.einsum("bchw,oc->bohw", y, w_fn)

    out = prenorm_forward(x, gamma, beta, fn)
    out = jax.block_until_ready(out)

    ref = _ref_prenorm(x, gamma, beta, fn)
    assert out.shape == ref.shape == (B, C, H, W)
    err = float(jnp.max(jnp.abs(out - ref)))
    assert err < 1e-4, f"max abs error {err}"
    print("KERNEL_OK")
</pallas_src>

<mosaic_0001>
module attributes {stable_mosaic.version = 11 : i64} {
  func.func @_groupnorm1_kernel(%arg0: i32, %arg1: memref<1x4x256xf32, #tpu.memory_space<vmem>>, %arg2: memref<4x1xf32, #tpu.memory_space<vmem>>, %arg3: memref<4x1xf32, #tpu.memory_space<vmem>>, %arg4: memref<1x4x256xf32, #tpu.memory_space<vmem>>) attributes {dimension_semantics = [#tpu.dimension_semantics<parallel>], iteration_bounds = array<i64: 2>, scalar_prefetch = 0 : i64, scratch_operands = 0 : i64, tpu.core_type = #tpu.core_type<tc>, window_params = [{transform_indices = @transform_0, window_bounds = array<i64: 1, 4, 256>}, {pipeline_mode = #tpu.pipeline_mode<synchronous>, transform_indices = @transform_1, window_bounds = array<i64: 4, 1>}, {pipeline_mode = #tpu.pipeline_mode<synchronous>, transform_indices = @transform_2, window_bounds = array<i64: 4, 1>}, {transform_indices = @transform_3, window_bounds = array<i64: 1, 4, 256>}]} {
    %c0 = arith.constant 0 : index
    %c0_0 = arith.constant 0 : index
    %c0_1 = arith.constant 0 : index
    %0 = vector.load %arg1[%c0, %c0_0, %c0_1] : memref<1x4x256xf32, #tpu.memory_space<vmem>>, vector<1x4x256xf32>
    %1 = vector.shape_cast %0 : vector<1x4x256xf32> to vector<4x256xf32>
    %2 = vector.shape_cast %1 : vector<4x256xf32> to vector<1x4x256xf32>
    %cst = arith.constant dense<0.000000e+00> : vector<1xf32>
    %3 = vector.multi_reduction <add>, %2, %cst [1, 2] : vector<1x4x256xf32> to vector<1xf32>
    %4 = vector.shape_cast %3 : vector<1xf32> to vector<1x1x1xf32>
    %5 = vector.extract %4[0, 0, 0] : f32 from vector<1x1x1xf32>
    %cst_2 = arith.constant 9.765625E-4 : f32
    %6 = arith.mulf %5, %cst_2 : f32
    %7 = vector.broadcast %6 : f32 to vector<4x256xf32>
    %8 = arith.subf %1, %7 : vector<4x256xf32>
    %9 = arith.mulf %8, %8 : vector<4x256xf32>
    %10 = vector.shape_cast %9 : vector<4x256xf32> to vector<1x4x256xf32>
    %cst_3 = arith.constant dense<0.000000e+00> : vector<1xf32>
    %11 = vector.multi_reduction <add>, %10, %cst_3 [1, 2] : vector<1x4x256xf32> to vector<1xf32>
    %12 = vector.shape_cast %11 : vector<1xf32> to vector<1x1x1xf32>
    %13 = vector.extract %12[0, 0, 0] : f32 from vector<1x1x1xf32>
    %cst_4 = arith.constant 9.765625E-4 : f32
    %14 = arith.mulf %13, %cst_4 : f32
    %cst_5 = arith.constant 9.99999974E-6 : f32
    %15 = arith.addf %14, %cst_5 : f32
    %16 = math.rsqrt %15 : f32
    %c0_6 = arith.constant 0 : index
    %c0_7 = arith.constant 0 : index
    %17 = vector.load %arg2[%c0_6, %c0_7] : memref<4x1xf32, #tpu.memory_space<vmem>>, vector<4x1xf32>
    %18 = vector.broadcast %16 : f32 to vector<4x1xf32>
    %19 = arith.mulf %17, %18 : vector<4x1xf32>
    %20 = vector.broadcast %19 : vector<4x1xf32> to vector<4x256xf32>
    %21 = arith.mulf %8, %20 : vector<4x256xf32>
    %c0_8 = arith.constant 0 : index
    %c0_9 = arith.constant 0 : index
    %22 = vector.load %arg3[%c0_8, %c0_9] : memref<4x1xf32, #tpu.memory_space<vmem>>, vector<4x1xf32>
    %23 = vector.broadcast %22 : vector<4x1xf32> to vector<4x256xf32>
    %24 = arith.addf %21, %23 : vector<4x256xf32>
    %c0_10 = arith.constant 0 : index
    %c0_11 = arith.constant 0 : index
    %c0_12 = arith.constant 0 : index
    %25 = vector.load %arg4[%c0_10, %c0_11, %c0_12] : memref<1x4x256xf32, #tpu.memory_space<vmem>>, vector<1x4x256xf32>
    %26 = vector.shape_cast %25 : vector<1x4x256xf32> to vector<4x256xf32>
    %27 = vector.shape_cast %24 : vector<4x256xf32> to vector<1x4x256xf32>
    tpu.vector_store %arg4[%c0_10, %c0_11, %c0_12], %27 {strides = array<i32>} : memref<1x4x256xf32, #tpu.memory_space<vmem>>, vector<1x4x256xf32>,
    return
  }
  func.func @transform_0(%arg0: i32) -> (i32, i32, i32) {
    %c0_i32 = arith.constant 0 : i32
    %c0_i32_0 = arith.constant 0 : i32
    %c0_i32_1 = arith.constant 0 : i32
    return %arg0, %c0_i32, %c0_i32_0 : i32, i32, i32
  }
  func.func @transform_1(%arg0: i32) -> (i32, i32) {
    %c0_i32 = arith.constant 0 : i32
    %c0_i32_0 = arith.constant 0 : i32
    %c0_i32_1 = arith.constant 0 : i32
    return %c0_i32, %c0_i32_0 : i32, i32
  }
  func.func @transform_2(%arg0: i32) -> (i32, i32) {
    %c0_i32 = arith.constant 0 : i32
    %c0_i32_0 = arith.constant 0 : i32
    %c0_i32_1 = arith.constant 0 : i32
    return %c0_i32, %c0_i32_0 : i32, i32
  }
  func.func @transform_3(%arg0: i32) -> (i32, i32, i32) {
    %c0_i32 = arith.constant 0 : i32
    %c0_i32_0 = arith.constant 0 : i32
    %c0_i32_1 = arith.constant 0 : i32
    return %arg0, %c0_i32, %c0_i32_0 : i32, i32, i32
  }
}

</mosaic_0001>

<llo_original>
// kernel: tpu_custom_call.1
$region0: #{tpu_custom_call.1}
  #allocation0 [shape = 'u32[]', space=smem, size = 0x4, offset = 0x4, fixed_abs, tag = 'smem constant byte address 0x4 - core index']
  #allocation1 [shape = 'u32[72,128]{1,0:T(1,128)}', space=vmem, size = 0x9000, scoped, tag = 'internal scratch']
  %s0 = inlined_call_operand.hbm [shape: f32[2,4,256], index: 0, kind: input, shape index: {}]
  %s1 = inlined_call_operand.vmem [shape: f32[4,1], index: 1, kind: input, shape index: {}]
  %s2 = inlined_call_operand.vmem [shape: f32[4,1], index: 2, kind: input, shape index: {}]
  %s3 = inlined_call_operand.hbm [shape: f32[2,4,256], index: 3, kind: output, shape index: {}]
  %s4 = sld [smem:[#allocation0]]
  $region49: #{tpu_custom_call.1} parent=0
    _
  %s6 = ssub.s32 1, %s4
  %s7 = scalar_select 0, %s6, %s4
  $region1: #{tpu_custom_call.1} parent=0
    #allocation2 [shape = 'u8[8192]{0}', space=vmem, size = 0x2000, scoped, tag = 'input window, operand 0']
    #allocation3 [shape = 's32[2]{0}', space=sflag, size = 0x8, scoped, tag = 'scoped memory for tpu_custom_call.1']
    #allocation4 [shape = 's32[2]{0}', space=sflag, size = 0x8, scoped, tag = 'scoped memory for tpu_custom_call.1']
    #allocation5 [shape = 'u8[8192]{0}', space=vmem, size = 0x2000, scoped, tag = 'output window, operand 0']
    %8 = vsyncpa [#allocation3], 0
    %s9 = scalar_lea.sflag [#allocation3], 1
    %10 = vsyncpa %s9, 0
    %11 = vsyncpa [#allocation4], 0
    %s12 = scalar_lea.sflag [#allocation4], 1
    %13 = vsyncpa %s12, 0
    loop: start=0, step=1, limit=4
    $region2: #{tpu_custom_call.1} parent=1 // loop_pre_header
      _
    $region3: #{tpu_custom_call.1} parent=1 // loop_header
      %s15 = sphi 0, %s19
      %p16 = scmp.ge.s32.totalorder %s15, 4
      %s25 = sphi 0, %s27
      %s28 = sphi 0, %s25
      %s29 = sphi 0, %s28
      %s45 = sphi 0, %s29
      %s49 = sphi 0, %s49
      %s51 = sphi 0, %s49
      %s52 = sphi 0, %s51
      %s66 = sphi 0, %s52
      %s70 = sphi 0, %s70
      %s72 = sphi 0, %s70
      %s73 = sphi 0, %s72
      %s87 = sphi 0, %s73
      %s93 = sphi 0, %s95
      %s96 = sphi 0, %s93
      %s97 = sphi 0, %s96
      %s113 = sphi 0, %s97
    $region4: #{tpu_custom_call.1} parent=1 // loop_header_branch
      %18 = sbr.rel (%p16) target = $region8
    $region5: #{tpu_custom_call.1} parent=1 // loop_body
      %s20 = ssub.s32 %s15, 1
      %s21 = ssub.s32 %s15, 2
      %s22 = sadd.s32 %s15, 1
      %s23 = ssub.s32 %s15, %s22
      %p24 = scmp.eq.s32.totalorder %s23, 0
      %s26 = sadd.s32 %s25, 1
      %s27 = scalar_select %p24, %s25, %s26
      %p30 = pneg %p24
      %p31 = scmp.eq.s32.totalorder %s15, 1
      %p32 = por %p30, %p31
      %p33 = scmp.ne.s32.totalorder %s25, %s28
      %p34 = scmp.eq.s32.totalorder %s15, 0
      %p35 = por %p33, %p34
      %p36 = scmp.ne.s32.totalorder %s25, %s28
      %p37 = scmp.eq.s32.totalorder %s20, 1
      %p38 = por %p36, %p37
      %p39 = scmp.ne.s32.totalorder %s28, %s29
      %p40 = scmp.eq.s32.totalorder %s20, 0
      %p41 = por %p39, %p40
      %p42 = scmp.ne.s32.totalorder %s28, %s29
      %p43 = scmp.eq.s32.totalorder %s21, 1
      %p44 = por %p42, %p43
      %p46 = scmp.ne.s32.totalorder %s29, %s45
      %p47 = scmp.eq.s32.totalorder %s21, 0
      %p48 = por %p46, %p47
      %s50 = sadd.s32 %s49, 1
      %p53 = scmp.eq.s32.totalorder %s15, 1
      %p54 = scmp.ne.s32.totalorder %s49, %s51
      %p55 = scmp.eq.s32.totalorder %s15, 0
      %p56 = por %p54, %p55
      %p57 = scmp.ne.s32.totalorder %s49, %s51
      %p58 = scmp.eq.s32.totalorder %s20, 1
      %p59 = por %p57, %p58
      %p60 = scmp.ne.s32.totalorder %s51, %s52
      %p61 = scmp.eq.s32.totalorder %s20, 0
      %p62 = por %p60, %p61
      %p63 = scmp.ne.s32.totalorder %s51, %s52
      %p64 = scmp.eq.s32.totalorder %s21, 1
      %p65 = por %p63, %p64
      %p67 = scmp.ne.s32.totalorder %s52, %s66
      %p68 = scmp.eq.s32.totalorder %s21, 0
      %p69 = por %p67, %p68
      %s71 = sadd.s32 %s70, 1
      %p74 = scmp.eq.s32.totalorder %s15, 1
      %p75 = scmp.ne.s32.totalorder %s70, %s72
      %p76 = scmp.eq.s32.totalorder %s15, 0
      %p77 = por %p75, %p76
      %p78 = scmp.ne.s32.totalorder %s70, %s72
      %p79 = scmp.eq.s32.totalorder %s20, 1
      %p80 = por %p78, %p79
      %p81 = scmp.ne.s32.totalorder %s72, %s73
      %p82 = scmp.eq.s32.totalorder %s20, 0
      %p83 = por %p81, %p82
      %p84 = scmp.ne.s32.totalorder %s72, %s73
      %p85 = scmp.eq.s32.totalorder %s21, 1
      %p86 = por %p84, %p85
      %p88 = scmp.ne.s32.totalorder %s73, %s87
      %p89 = scmp.eq.s32.totalorder %s21, 0
      %p90 = por %p88, %p89
      %s91 = ssub.s32 %s15, %s22
      %p92 = scmp.eq.s32.totalorder %s91, 0
      %s94 = sadd.s32 %s93, 1
      %s95 = scalar_select %p92, %s93, %s94
      %p98 = pneg %p92
      %p99 = scmp.eq.s32.totalorder %s15, 1
      %p100 = por %p98, %p99
      %p101 = scmp.ne.s32.totalorder %s93, %s96
      %p102 = scmp.eq.s32.totalorder %s15, 0
      %p103 = por %p101, %p102
      %p104 = scmp.ne.s32.totalorder %s93, %s96
      %p105 = scmp.eq.s32.totalorder %s20, 1
      %p106 = por %p104, %p105
      %p107 = scmp.ne.s32.totalorder %s96, %s97
      %p108 = scmp.eq.s32.totalorder %s20, 0
      %p109 = por %p107, %p108
      %p110 = scmp.ne.s32.totalorder %s96, %s97
      %p111 = scmp.eq.s32.totalorder %s21, 1
      %p112 = por %p110, %p111
      %p114 = scmp.ne.s32.totalorder %s97, %s113
      %p115 = scmp.eq.s32.totalorder %s21, 0
      %p116 = por %p114, %p115
      %p117 = scmp.le.s32.totalorder 1, %s15
      %p118 = scmp.lt.s32.totalorder %s15, 3
      %p119 = pnand %p117, %p118
      %p120 = pneg %p119
      // Predicated region
      $region9: #{tpu_custom_call.1} parent=5 // pred_check
        _
      $region10: #{tpu_custom_call.1} parent=5 // pred_check_branch
        %122 = sbr.rel (%p119) target = $region12
      $region11: #{tpu_custom_call.1} parent=5 // pred_region
        %s123 = ssub.s32 %s15, 1
        // Predicated region
        $region13: #{tpu_custom_call.1} parent=11 // pred_check
          %p124 = pneg %p62
        $region14: #{tpu_custom_call.1} parent=11 // pred_check_branch
          %126 = sbr.rel (%p124) target = $region16
        $region15: #{tpu_custom_call.1} parent=11 // pred_region
          _
        $region16: #{tpu_custom_call.1} parent=11 // pred_fallthru
          _
        // Predicated region
        $region17: #{tpu_custom_call.1} parent=11 // pred_check
          %p127 = pneg %p83
        $region18: #{tpu_custom_call.1} parent=11 // pred_check_branch
          %129 = sbr.rel (%p127) target = $region20
        $region19: #{tpu_custom_call.1} parent=11 // pred_region
          _
        $region20: #{tpu_custom_call.1} parent=11 // pred_fallthru
          _
      $region12: #{tpu_custom_call.1} parent=5 // pred_fallthru
        _
      %p130 = scmp.lt.s32.totalorder %s15, 2
      // Predicated region
      $region21: #{tpu_custom_call.1} parent=5 // pred_check
        %p131 = pneg %p130
      $region22: #{tpu_custom_call.1} parent=5 // pred_check_branch
        %133 = sbr.rel (%p131) target = $region24
      $region23: #{tpu_custom_call.1} parent=5 // pred_region
        // Predicated region
        $region25: #{tpu_custom_call.1} parent=23 // pred_check
          %p134 = pneg %p35
        $region26: #{tpu_custom_call.1} parent=23 // pred_check_branch
          %136 = sbr.rel (%p134) target = $region28
        $region27: #{tpu_custom_call.1} parent=23 // pred_region
          %s137 = sand.u32 %s25, 1
          %s138 = scalar_lea.sflag [#allocation3], %s137
          %s139 = sand.u32 %s25, 1
          %s140 = smul.addr %s139, 8
          %s141 = scalar_lea.vmem [#allocation2], %s140
          %143 = vsyncadd %s138, 0
          %s144 = smul.addr %s15, 2
          %s145 = smul.addr %s144, 4
          %s146 = scalar_lea.hbm %s0, %s145
          %s148 = sshll.u32 %s146, 4
          %s149 = int_to_ptr.hbm [resolvable:$true] %s148
          %s150 = sshll.u32 %s141, 4
          %s151 = int_to_ptr.vmem [resolvable:$true] %s150
          %153 = dma.hbm_to_vmem [thread:$0]  %s149, 128, %s151, %s138
        $region28: #{tpu_custom_call.1} parent=23 // pred_fallthru
          _
      $region24: #{tpu_custom_call.1} parent=5 // pred_fallthru
        _
      %p154 = scmp.le.s32.totalorder 1, %s15
      %p155 = scmp.lt.s32.totalorder %s15, 3
      %p156 = pnand %p154, %p155
      %p157 = pneg %p156
      // Predicated region
      $region29: #{tpu_custom_call.1} parent=5 // pred_check
        _
      $region30: #{tpu_custom_call.1} parent=5 // pred_check_branch
        %159 = sbr.rel (%p156) target = $region32
      $region31: #{tpu_custom_call.1} parent=5 // pred_region
        %s160 = ssub.s32 %s15, 1
        %s161 = sand.u32 %s28, 1
        %s162 = scalar_lea.sflag [#allocation3], %s161
        %s163 = sand.u32 %s28, 1
        %s164 = smul.addr %s163, 8
        %s165 = scalar_lea.vmem [#allocation2], %s164
        // Predicated region
        $region33: #{tpu_custom_call.1} parent=31 // pred_check
          %p166 = pneg %p41
        $region34: #{tpu_custom_call.1} parent=31 // pred_check_branch
          %168 = sbr.rel (%p166) target = $region36
        $region35: #{tpu_custom_call.1} parent=31 // pred_region
          %170 = dma.done %s162, 128
        $region36: #{tpu_custom_call.1} parent=31 // pred_fallthru
          _
        %s171 = sand.u32 %s28, 1
        %s172 = scalar_lea.sflag [#allocation3], %s171
        %s173 = sand.u32 %s28, 1
        %s174 = smul.addr %s173, 8
        %s175 = scalar_lea.vmem [#allocation2], %s174
        %p176 = pneg %p41
        %p177 = pneg %p38
        %p178 = pneg %p62
        %p179 = pneg %p59
        %p180 = pneg %p83
        %p181 = pneg %p80
        %p182 = pneg %p109
        %p183 = pneg %p106
        %s184 = sand.u32 %s96, 1
        %s185 = scalar_lea.sflag [#allocation4], %s184
        %s186 = sand.u32 %s96, 1
        %s187 = smul.addr %s186, 8
        %s188 = scalar_lea.vmem [#allocation5], %s187
        %v189 = vld [vmem:[%s165] sm:$0xff]
        %191 = vst [vmem:[#allocation1] ss:$2 sm:$0xff] %v189
        %v192 = vld.sshfl [vmem:[#allocation1] sm:$0xff pattern:$0x75316420]
        %v193 = vld.sshfl [vmem:[#allocation1 + $0x8] sm:$0xff pattern:$0x75316420]
        %vm196 = vcmask 1043456
        %v197 = vsel %vm196, %v192, 0.0
        %v198 = vsel %vm196, %v193, 0.0
        %v199 = vadd.f32 %v197, %v198
        %200 = vadd.xlane.f32.xlu0 %v199
        %v201 = vpop.xlane.xlu0 %200
        %v202 = vrot.slane %v201, 4
        %v203 = vadd.f32 %v201, %v202
        %v204 = vrot.slane %v203, 2
        %v205 = vadd.f32 %v203, %v204
        %v206 = vrot.slane %v205, 1
        %v207 = vadd.f32 %v205, %v206
        %s208 = vtos %v207
        %s209 = smul.f32 %s208, 0.0009765625
        %v210 = vstv %s209
        %v211 = vsub.f32 %v189, %v210
        %v212 = vmul.f32 %v211, %v211
        %214 = vst [vmem:[#allocation1] ss:$2 sm:$0xff] %v212
        %v215 = vld.sshfl [vmem:[#allocation1] sm:$0xff pattern:$0x75316420]
        %v216 = vld.sshfl [vmem:[#allocation1 + $0x8] sm:$0xff pattern:$0x75316420]
        %v219 = vsel %vm196, %v215, 0.0
        %v220 = vsel %vm196, %v216, 0.0
        %v221 = vadd.f32 %v219, %v220
        %222 = vadd.xlane.f32.xlu0 %v221
        %v223 = vpop.xlane.xlu0 %222
        %v224 = vrot.slane %v223, 4
        %v225 = vadd.f32 %v223, %v224
        %v226 = vrot.slane %v225, 2
        %v227 = vadd.f32 %v225, %v226
        %v228 = vrot.slane %v227, 1
        %v229 = vadd.f32 %v227, %v228
        %s230 = vtos %v229
        %s231 = smul.f32 %s230, 0.0009765625
        %s232 = sadd.f32 %s231, 1e-05
        %v233 = vstv %s232
        %v234 = vrsqrt.pop %v233
        %v235 = vmul.f32 %v234, %v233
        %v236 = vmul.f32 %v235, %v234
        %v237 = vmul.f32 0.5, %v236
        %v238 = vsub.f32 1.5, %v237
        %v239 = vmul.f32 %v234, %v238
        %vm240 = vweird.f32 %v233
        %vm241 = vweird.f32 %v234
        %vm242 = vmor %vm240, %vm241
        %v243 = vsel %vm242, %v234, %v239
        %s244 = vtos %v243
        %v245 = vld [vmem:[%s1] sm:$0xf]
        %v246 = vstv %s244
        %v247 = vmul.f32 %v245, %v246
        %249 = vset.pattern.permute.xlu0 0
        %250 = vperm.xlu0 %249, %v247
        %v251 = vpop.permute.xlu0 %250
        %v253 = vunpack.c.l.s4 839922192
        %v254 = vunpack.c.0.s8 %v253
        %v255 = vperm.slane %v251, %v254
        %v257 = vmul.f32 %v211, %v255
        %v258 = vld [vmem:[%s2] sm:$0xf]
        %260 = vset.pattern.permute.xlu0 0
        %261 = vperm.xlu0 %260, %v258
        %v262 = vpop.permute.xlu0 %261
        %v264 = vunpack.c.l.s4 839922192
        %v265 = vunpack.c.0.s8 %v264
        %v266 = vperm.slane %v262, %v265
        %v268 = vadd.f32 %v257, %v266
        %269 = vst [vmem:[%s188] sm:$0xff] %v268
        %s270 = sand.u32 %s96, 1
        %s271 = scalar_lea.sflag [#allocation4], %s270
        %s272 = sand.u32 %s96, 1
        %s273 = smul.addr %s272, 8
        %s274 = scalar_lea.vmem [#allocation5], %s273
        // Predicated region
        $region37: #{tpu_custom_call.1} parent=31 // pred_check
          %p275 = pneg %p106
        $region38: #{tpu_custom_call.1} parent=31 // pred_check_branch
          %277 = sbr.rel (%p275) target = $region40
        $region39: #{tpu_custom_call.1} parent=31 // pred_region
          %279 = vsyncadd %s271, 0
          %s280 = smul.addr %s20, 2
          %s281 = smul.addr %s280, 4
          %s282 = scalar_lea.hbm %s3, %s281
          %s284 = sshll.u32 %s274, 4
          %s285 = int_to_ptr.vmem [resolvable:$true] %s284
          %s286 = sshll.u32 %s282, 4
          %s287 = int_to_ptr.hbm [resolvable:$true] %s286
          %289 = dma.vmem_to_hbm [thread:$0]  %s285, 128, %s287, %s271
        $region40: #{tpu_custom_call.1} parent=31 // pred_fallthru
          _
      $region32: #{tpu_custom_call.1} parent=5 // pred_fallthru
        _
      %p290 = scmp.le.s32.totalorder 2, %s15
      // Predicated region
      $region41: #{tpu_custom_call.1} parent=5 // pred_check
        %p291 = pneg %p290
      $region42: #{tpu_custom_call.1} parent=5 // pred_check_branch
        %293 = sbr.rel (%p291) target = $region44
      $region43: #{tpu_custom_call.1} parent=5 // pred_region
        %s294 = ssub.s32 %s15, 2
        // Predicated region
        $region45: #{tpu_custom_call.1} parent=43 // pred_check
          %p295 = pneg %p112
        $region46: #{tpu_custom_call.1} parent=43 // pred_check_branch
          %297 = sbr.rel (%p295) target = $region48
        $region47: #{tpu_custom_call.1} parent=43 // pred_region
          %s298 = sand.u32 %s97, 1
          %s299 = scalar_lea.sflag [#allocation4], %s298
          %s300 = sand.u32 %s97, 1
          %s301 = smul.addr %s300, 8
          %s302 = scalar_lea.vmem [#allocation5], %s301
          %304 = dma.done %s299, 128
        $region48: #{tpu_custom_call.1} parent=43 // pred_fallthru
          _
      $region44: #{tpu_custom_call.1} parent=5 // pred_fallthru
        _
    $region6: #{tpu_custom_call.1} parent=1 // loop_footer
      %s19 = sadd.s32 1, %s15
    $region7: #{tpu_custom_call.1} parent=1 // loop_footer_branch
      %14 = sbr.rel target = $region3
    $region8: #{tpu_custom_call.1} parent=1 // loop_exit
      _
    %305 = vsyncpa [#allocation3], 1
    %s306 = scalar_lea.sflag [#allocation3], 1
    %307 = vsyncpa %s306, 1
    %308 = vsyncpa [#allocation4], 1
    %s309 = scalar_lea.sflag [#allocation4], 1
    %310 = vsyncpa %s309, 1

</llo_original>
